<compile_context>
chip_gen: v7x
topology: tpu7x:2x2x1
jax: 0.10.0
libtpu: 0.0.40
codegen_flags: <defaults>
</compile_context>

<pallas_src>
import functools

import jax
import jax.numpy as jnp
from jax.experimental import pallas as pl
from jax.experimental.pallas import tpu as pltpu


def actor_kernel(x_ref, w1_ref, b1_ref, w2_ref, b2_ref, w3_ref, b3_ref,
                 wm_ref, bm_ref, o_ref):
    # fc1 + relu  (bf16 operands, f32 accumulate, f32 elementwise)
    h = jnp.dot(x_ref[...], w1_ref[...],
                preferred_element_type=jnp.float32) + b1_ref[...]
    h = jnp.maximum(h, 0.0)
    # fc2 + relu
    h = jnp.dot(h.astype(jnp.bfloat16), w2_ref[...],
                preferred_element_type=jnp.float32) + b2_ref[...]
    h = jnp.maximum(h, 0.0)
    # fc3 + relu
    h = jnp.dot(h.astype(jnp.bfloat16), w3_ref[...],
                preferred_element_type=jnp.float32) + b3_ref[...]
    h = jnp.maximum(h, 0.0)
    # mu + tanh
    h = jnp.dot(h.astype(jnp.bfloat16), wm_ref[...],
                preferred_element_type=jnp.float32) + bm_ref[...]
    # TODO(synk): if profiling shows the nA-wide (masked) store exposed at very
    # large B, fold 16 batch rows into one lane-dense 128-wide output row.
    o_ref[...] = jnp.tanh(h).astype(o_ref.dtype)


def _round_up(x, m):
    return (x + m - 1) // m * m


@functools.partial(jax.jit, static_argnames=("block_b",))
def actor_forward(state, params, block_b=512):
    w1, b1, w2, b2, w3, b3, wm, bm = params
    B, in_dims = state.shape
    f1, f2, f3 = w1.shape[1], w2.shape[1], w3.shape[1]
    nA = wm.shape[1]

    # Batch tile: 512 rows for throughput (fills MXU M dimension, amortizes
    # per-grid-step overhead); for small B just use the 8-row-aligned batch.
    TB = block_b if B >= block_b else _round_up(max(B, 1), 8)
    B_pad = _round_up(B, TB)

    # bf16 operands for the MXU; biases stay f32 (f32 bias-add/ReLU/tanh).
    x = state.astype(jnp.bfloat16)
    if B_pad != B:
        x = jnp.pad(x, ((0, B_pad - B), (0, 0)))
    w1b, w2b, w3b, wmb = (w.astype(jnp.bfloat16) for w in (w1, w2, w3, wm))
    b1f, b2f, b3f, bmf = (b.astype(jnp.float32) for b in (b1, b2, b3, bm))

    grid = (B_pad // TB,)
    x_map = lambda i: (i, 0)        # batch-tiled
    w_map = lambda i: (0, 0)        # VMEM-resident across all grid steps

    flops = 2 * B_pad * (in_dims * f1 + f1 * f2 + f2 * f3 + f3 * nA)
    weight_bytes = 2 * (in_dims * f1 + f1 * f2 + f2 * f3 + f3 * nA) \
        + 4 * (f1 + f2 + f3 + nA)
    bytes_accessed = B_pad * in_dims * 2 + B_pad * nA * 4 + weight_bytes
    cost = pl.CostEstimate(flops=flops,
                           transcendentals=B_pad * nA,
                           bytes_accessed=bytes_accessed)

    out = pl.pallas_call(
        actor_kernel,
        out_shape=jax.ShapeDtypeStruct((B_pad, nA), jnp.float32),
        grid=grid,
        in_specs=[
            pl.BlockSpec((TB, in_dims), x_map),
            pl.BlockSpec(w1b.shape, w_map),
            pl.BlockSpec(b1f.shape, w_map),
            pl.BlockSpec(w2b.shape, w_map),
            pl.BlockSpec(b2f.shape, w_map),
            pl.BlockSpec(w3b.shape, w_map),
            pl.BlockSpec(b3f.shape, w_map),
            pl.BlockSpec(wmb.shape, w_map),
            pl.BlockSpec(bmf.shape, w_map),
        ],
        out_specs=pl.BlockSpec((TB, nA), x_map),
        compiler_params=pltpu.CompilerParams(
            dimension_semantics=("parallel",)),
        cost_estimate=cost,
    )(x, w1b, b1f, w2b, b2f, w3b, b3f, wmb, bmf)

    return out[:B]


def init_linear(key, fan_in, fan_out):
    # Deterministic init mimicking PyTorch nn.Linear default (U[-1/sqrt(fan_in), +]).
    kw, kb = jax.random.split(key)
    bound = 1.0 / jnp.sqrt(float(fan_in))
    w = jax.random.uniform(kw, (fan_in, fan_out), jnp.float32, -bound, bound)
    b = jax.random.uniform(kb, (1, fan_out), jnp.float32, -bound, bound)
    return w, b


def reference_forward(state, params):
    w1, b1, w2, b2, w3, b3, wm, bm = params
    h = jax.nn.relu(state @ w1 + b1)
    h = jax.nn.relu(h @ w2 + b2)
    h = jax.nn.relu(h @ w3 + b3)
    return jnp.tanh(h @ wm + bm)


if __name__ == "__main__":
    # Small shapes consistent with the module: input_dims = state dim + goal dim.
    batch = 8
    input_dims = 16
    fc1_dims, fc2_dims, fc3_dims = 64, 64, 32
    nA = 8

    key = jax.random.PRNGKey(0)
    k_x, k1, k2, k3, k4, k_big = jax.random.split(key, 6)

    state = jax.random.normal(k_x, (batch, input_dims), jnp.float32)
    w1, b1 = init_linear(k1, input_dims, fc1_dims)
    w2, b2 = init_linear(k2, fc1_dims, fc2_dims)
    w3, b3 = init_linear(k3, fc2_dims, fc3_dims)
    wm, bm = init_linear(k4, fc3_dims, nA)
    params = (w1, b1, w2, b2, w3, b3, wm, bm)

    # Small-batch path (single grid step).
    out = jax.block_until_ready(actor_forward(state, params))
    ref = reference_forward(state, params)
    assert out.shape == (batch, nA)
    # bf16 MXU operands (f32 accumulation) -> looser tolerance vs f32 reference.
    assert jnp.allclose(out, ref, atol=2e-2, rtol=2e-2), "mismatch vs reference (small batch)"

    # Larger, non-tile-multiple batch: exercises batch tiling + padding path.
    big_B = 1000
    big_state = jax.random.normal(k_big, (big_B, input_dims), jnp.float32)
    out_big = jax.block_until_ready(actor_forward(big_state, params))
    ref_big = reference_forward(big_state, params)
    assert out_big.shape == (big_B, nA)
    assert jnp.allclose(out_big, ref_big, atol=2e-2, rtol=2e-2), "mismatch vs reference (tiled batch)"

    print("KERNEL_OK")
</pallas_src>

<mosaic_0001>
module attributes {stable_mosaic.version = 11 : i64} {
  func.func @actor_kernel(%arg0: i32, %arg1: memref<8x16xbf16, #tpu.memory_space<vmem>>, %arg2: memref<16x64xbf16, #tpu.memory_space<vmem>>, %arg3: memref<1x64xf32, #tpu.memory_space<vmem>>, %arg4: memref<64x64xbf16, #tpu.memory_space<vmem>>, %arg5: memref<1x64xf32, #tpu.memory_space<vmem>>, %arg6: memref<64x32xbf16, #tpu.memory_space<vmem>>, %arg7: memref<1x32xf32, #tpu.memory_space<vmem>>, %arg8: memref<32x8xbf16, #tpu.memory_space<vmem>>, %arg9: memref<1x8xf32, #tpu.memory_space<vmem>>, %arg10: memref<8x8xf32, #tpu.memory_space<vmem>>) attributes {dimension_semantics = [#tpu.dimension_semantics<parallel>], iteration_bounds = array<i64: 1>, scalar_prefetch = 0 : i64, scratch_operands = 0 : i64, tpu.core_type = #tpu.core_type<tc>, window_params = [{transform_indices = @transform_0, window_bounds = array<i64: 8, 16>}, {pipeline_mode = #tpu.pipeline_mode<synchronous>, transform_indices = @transform_1, window_bounds = array<i64: 16, 64>}, {pipeline_mode = #tpu.pipeline_mode<synchronous>, transform_indices = @transform_2, window_bounds = array<i64: 1, 64>}, {pipeline_mode = #tpu.pipeline_mode<synchronous>, transform_indices = @transform_3, window_bounds = array<i64: 64, 64>}, {pipeline_mode = #tpu.pipeline_mode<synchronous>, transform_indices = @transform_4, window_bounds = array<i64: 1, 64>}, {pipeline_mode = #tpu.pipeline_mode<synchronous>, transform_indices = @transform_5, window_bounds = array<i64: 64, 32>}, {pipeline_mode = #tpu.pipeline_mode<synchronous>, transform_indices = @transform_6, window_bounds = array<i64: 1, 32>}, {pipeline_mode = #tpu.pipeline_mode<synchronous>, transform_indices = @transform_7, window_bounds = array<i64: 32, 8>}, {pipeline_mode = #tpu.pipeline_mode<synchronous>, transform_indices = @transform_8, window_bounds = array<i64: 1, 8>}, {transform_indices = @transform_9, window_bounds = array<i64: 8, 8>}]} {
    %c0 = arith.constant 0 : index
    %c0_0 = arith.constant 0 : index
    %0 = vector.load %arg1[%c0, %c0_0] : memref<8x16xbf16, #tpu.memory_space<vmem>>, vector<8x16xbf16>
    %c0_1 = arith.constant 0 : index
    %c0_2 = arith.constant 0 : index
    %1 = vector.load %arg2[%c0_1, %c0_2] : memref<16x64xbf16, #tpu.memory_space<vmem>>, vector<16x64xbf16>
    %cst = arith.constant dense<0.000000e+00> : vector<8x64xf32>
    %2 = tpu.matmul %0, %1, %cst {dimension_numbers = #tpu.dot_dimension_numbers<[1], [0], [0], [1], [0, 0, 1, 1], [], []>} : vector<8x16xbf16>, vector<16x64xbf16>, vector<8x64xf32> -> vector<8x64xf32>
    %c0_3 = arith.constant 0 : index
    %c0_4 = arith.constant 0 : index
    %3 = vector.load %arg3[%c0_3, %c0_4] : memref<1x64xf32, #tpu.memory_space<vmem>>, vector<1x64xf32>
    %4 = vector.broadcast %3 : vector<1x64xf32> to vector<8x64xf32>
    %5 = arith.addf %2, %4 : vector<8x64xf32>
    %cst_5 = arith.constant 0.000000e+00 : f32
    %6 = vector.broadcast %cst_5 : f32 to vector<8x64xf32>
    %7 = arith.maximumf %5, %6 : vector<8x64xf32>
    %8 = arith.truncf %7 : vector<8x64xf32> to vector<8x64xbf16>
    %c0_6 = arith.constant 0 : index
    %c0_7 = arith.constant 0 : index
    %9 = vector.load %arg4[%c0_6, %c0_7] : memref<64x64xbf16, #tpu.memory_space<vmem>>, vector<64x64xbf16>
    %cst_8 = arith.constant dense<0.000000e+00> : vector<8x64xf32>
    %10 = tpu.matmul %8, %9, %cst_8 {dimension_numbers = #tpu.dot_dimension_numbers<[1], [0], [0], [1], [0, 0, 1, 1], [], []>} : vector<8x64xbf16>, vector<64x64xbf16>, vector<8x64xf32> -> vector<8x64xf32>
    %c0_9 = arith.constant 0 : index
    %c0_10 = arith.constant 0 : index
    %11 = vector.load %arg5[%c0_9, %c0_10] : memref<1x64xf32, #tpu.memory_space<vmem>>, vector<1x64xf32>
    %12 = vector.broadcast %11 : vector<1x64xf32> to vector<8x64xf32>
    %13 = arith.addf %10, %12 : vector<8x64xf32>
    %cst_11 = arith.constant 0.000000e+00 : f32
    %14 = vector.broadcast %cst_11 : f32 to vector<8x64xf32>
    %15 = arith.maximumf %13, %14 : vector<8x64xf32>
    %16 = arith.truncf %15 : vector<8x64xf32> to vector<8x64xbf16>
    %c0_12 = arith.constant 0 : index
    %c0_13 = arith.constant 0 : index
    %17 = vector.load %arg6[%c0_12, %c0_13] : memref<64x32xbf16, #tpu.memory_space<vmem>>, vector<64x32xbf16>
    %cst_14 = arith.constant dense<0.000000e+00> : vector<8x32xf32>
    %18 = tpu.matmul %16, %17, %cst_14 {dimension_numbers = #tpu.dot_dimension_numbers<[1], [0], [0], [1], [0, 0, 1, 1], [], []>} : vector<8x64xbf16>, vector<64x32xbf16>, vector<8x32xf32> -> vector<8x32xf32>
    %c0_15 = arith.constant 0 : index
    %c0_16 = arith.constant 0 : index
    %19 = vector.load %arg7[%c0_15, %c0_16] : memref<1x32xf32, #tpu.memory_space<vmem>>, vector<1x32xf32>
    %20 = vector.broadcast %19 : vector<1x32xf32> to vector<8x32xf32>
    %21 = arith.addf %18, %20 : vector<8x32xf32>
    %cst_17 = arith.constant 0.000000e+00 : f32
    %22 = vector.broadcast %cst_17 : f32 to vector<8x32xf32>
    %23 = arith.maximumf %21, %22 : vector<8x32xf32>
    %24 = arith.truncf %23 : vector<8x32xf32> to vector<8x32xbf16>
    %c0_18 = arith.constant 0 : index
    %c0_19 = arith.constant 0 : index
    %25 = vector.load %arg8[%c0_18, %c0_19] : memref<32x8xbf16, #tpu.memory_space<vmem>>, vector<32x8xbf16>
    %cst_20 = arith.constant dense<0.000000e+00> : vector<8x8xf32>
    %26 = tpu.matmul %24, %25, %cst_20 {dimension_numbers = #tpu.dot_dimension_numbers<[1], [0], [0], [1], [0, 0, 1, 1], [], []>} : vector<8x32xbf16>, vector<32x8xbf16>, vector<8x8xf32> -> vector<8x8xf32>
    %c0_21 = arith.constant 0 : index
    %c0_22 = arith.constant 0 : index
    %27 = vector.load %arg9[%c0_21, %c0_22] : memref<1x8xf32, #tpu.memory_space<vmem>>, vector<1x8xf32>
    %28 = vector.broadcast %27 : vector<1x8xf32> to vector<8x8xf32>
    %29 = arith.addf %26, %28 : vector<8x8xf32>
    %30 = math.tanh %29 : vector<8x8xf32>
    %c0_23 = arith.constant 0 : index
    %c0_24 = arith.constant 0 : index
    %31 = vector.load %arg10[%c0_23, %c0_24] : memref<8x8xf32, #tpu.memory_space<vmem>>, vector<8x8xf32>
    tpu.vector_store %arg10[%c0_23, %c0_24], %30 {strides = array<i32>} : memref<8x8xf32, #tpu.memory_space<vmem>>, vector<8x8xf32>,
    return
  }
  func.func @transform_0(%arg0: i32) -> (i32, i32) {
    %c0_i32 = arith.constant 0 : i32
    %c0_i32_0 = arith.constant 0 : i32
    return %arg0, %c0_i32 : i32, i32
  }
  func.func @transform_1(%arg0: i32) -> (i32, i32) {
    %c0_i32 = arith.constant 0 : i32
    %c0_i32_0 = arith.constant 0 : i32
    %c0_i32_1 = arith.constant 0 : i32
    return %c0_i32, %c0_i32_0 : i32, i32
  }
  func.func @transform_2(%arg0: i32) -> (i32, i32) {
    %c0_i32 = arith.constant 0 : i32
    %c0_i32_0 = arith.constant 0 : i32
    %c0_i32_1 = arith.constant 0 : i32
    return %c0_i32, %c0_i32_0 : i32, i32
  }
  func.func @transform_3(%arg0: i32) -> (i32, i32) {
    %c0_i32 = arith.constant 0 : i32
    %c0_i32_0 = arith.constant 0 : i32
    %c0_i32_1 = arith.constant 0 : i32
    return %c0_i32, %c0_i32_0 : i32, i32
  }
  func.func @transform_4(%arg0: i32) -> (i32, i32) {
    %c0_i32 = arith.constant 0 : i32
    %c0_i32_0 = arith.constant 0 : i32
    %c0_i32_1 = arith.constant 0 : i32
    return %c0_i32, %c0_i32_0 : i32, i32
  }
  func.func @transform_5(%arg0: i32) -> (i32, i32) {
    %c0_i32 = arith.constant 0 : i32
    %c0_i32_0 = arith.constant 0 : i32
    %c0_i32_1 = arith.constant 0 : i32
    return %c0_i32, %c0_i32_0 : i32, i32
  }
  func.func @transform_6(%arg0: i32) -> (i32, i32) {
    %c0_i32 = arith.constant 0 : i32
    %c0_i32_0 = arith.constant 0 : i32
    %c0_i32_1 = arith.constant 0 : i32
    return %c0_i32, %c0_i32_0 : i32, i32
  }
  func.func @transform_7(%arg0: i32) -> (i32, i32) {
    %c0_i32 = arith.constant 0 : i32
    %c0_i32_0 = arith.constant 0 : i32
    %c0_i32_1 = arith.constant 0 : i32
    return %c0_i32, %c0_i32_0 : i32, i32
  }
  func.func @transform_8(%arg0: i32) -> (i32, i32) {
    %c0_i32 = arith.constant 0 : i32
    %c0_i32_0 = arith.constant 0 : i32
    %c0_i32_1 = arith.constant 0 : i32
    return %c0_i32, %c0_i32_0 : i32, i32
  }
  func.func @transform_9(%arg0: i32) -> (i32, i32) {
    %c0_i32 = arith.constant 0 : i32
    %c0_i32_0 = arith.constant 0 : i32
    return %arg0, %c0_i32 : i32, i32
  }
}

</mosaic_0001>

<llo_original>
// kernel: actor_forward.1
$region0: #{actor_forward.1}
  #allocation0 [shape = 'u32[]', space=smem, size = 0x4, offset = 0x4, fixed_abs, tag = 'smem constant byte address 0x4 - core index']
  #allocation1 [shape = 'u32[144,128]{1,0:T(1,128)}', space=vmem, size = 0x12000, scoped, tag = 'internal scratch']
  %s0 = inlined_call_operand.vmem [shape: bf16[8,16], index: 0, kind: input, shape index: {}]
  %s1 = inlined_call_operand.vmem [shape: bf16[16,64], index: 1, kind: input, shape index: {}]
  %s2 = inlined_call_operand.vmem [shape: f32[1,64], index: 2, kind: input, shape index: {}]
  %s3 = inlined_call_operand.vmem [shape: bf16[64,64], index: 3, kind: input, shape index: {}]
  %s4 = inlined_call_operand.vmem [shape: f32[1,64], index: 4, kind: input, shape index: {}]
  %s5 = inlined_call_operand.vmem [shape: bf16[64,32], index: 5, kind: input, shape index: {}]
  %s6 = inlined_call_operand.vmem [shape: f32[1,32], index: 6, kind: input, shape index: {}]
  %s7 = inlined_call_operand.vmem [shape: bf16[32,8], index: 7, kind: input, shape index: {}]
  %s8 = inlined_call_operand.vmem [shape: f32[1,8], index: 8, kind: input, shape index: {}]
  %s9 = inlined_call_operand.hbm [shape: f32[8,8], index: 9, kind: output, shape index: {}]
  %s10 = sld [smem:[#allocation0]]
  $region46: #{actor_forward.1} parent=0
    _
  %s12 = ssub.s32 1, %s10
  %s13 = scalar_select 0, %s12, %s10
  $region1: #{actor_forward.1} parent=0
    #allocation2 [shape = 'u8[4096]{0}', space=vmem, size = 0x1000, scoped, tag = 'output window, operand 0, single buffered']
    #allocation3 [shape = 's32[1]{0}', space=sflag, size = 0x4, scoped, tag = 'scoped memory for actor_forward.1']
    %14 = vsyncpa [#allocation3], 0
    // Predicated region
    $region2: #{actor_forward.1} parent=1 // pred_check
      _
    $region3: #{actor_forward.1} parent=1 // pred_check_branch
      %16 = sbr.rel (0) target = $region5
    $region4: #{actor_forward.1} parent=1 // pred_region
      _
    $region5: #{actor_forward.1} parent=1 // pred_fallthru
      _
    // Predicated region
    $region6: #{actor_forward.1} parent=1 // pred_check
      _
    $region7: #{actor_forward.1} parent=1 // pred_check_branch
      %18 = sbr.rel (0) target = $region9
    $region8: #{actor_forward.1} parent=1 // pred_region
      _
    $region9: #{actor_forward.1} parent=1 // pred_fallthru
      _
    // Predicated region
    $region10: #{actor_forward.1} parent=1 // pred_check
      _
    $region11: #{actor_forward.1} parent=1 // pred_check_branch
      %20 = sbr.rel (0) target = $region13
    $region12: #{actor_forward.1} parent=1 // pred_region
      _
    $region13: #{actor_forward.1} parent=1 // pred_fallthru
      _
    // Predicated region
    $region14: #{actor_forward.1} parent=1 // pred_check
      _
    $region15: #{actor_forward.1} parent=1 // pred_check_branch
      %22 = sbr.rel (0) target = $region17
    $region16: #{actor_forward.1} parent=1 // pred_region
      _
    $region17: #{actor_forward.1} parent=1 // pred_fallthru
      _
    // Predicated region
    $region18: #{actor_forward.1} parent=1 // pred_check
      _
    $region19: #{actor_forward.1} parent=1 // pred_check_branch
      %24 = sbr.rel (0) target = $region21
    $region20: #{actor_forward.1} parent=1 // pred_region
      _
    $region21: #{actor_forward.1} parent=1 // pred_fallthru
      _
    // Predicated region
    $region22: #{actor_forward.1} parent=1 // pred_check
      _
    $region23: #{actor_forward.1} parent=1 // pred_check_branch
      %26 = sbr.rel (0) target = $region25
    $region24: #{actor_forward.1} parent=1 // pred_region
      _
    $region25: #{actor_forward.1} parent=1 // pred_fallthru
      _
    // Predicated region
    $region26: #{actor_forward.1} parent=1 // pred_check
      _
    $region27: #{actor_forward.1} parent=1 // pred_check_branch
      %28 = sbr.rel (0) target = $region29
    $region28: #{actor_forward.1} parent=1 // pred_region
      _
    $region29: #{actor_forward.1} parent=1 // pred_fallthru
      _
    // Predicated region
    $region30: #{actor_forward.1} parent=1 // pred_check
      _
    $region31: #{actor_forward.1} parent=1 // pred_check_branch
      %30 = sbr.rel (0) target = $region33
    $region32: #{actor_forward.1} parent=1 // pred_region
      _
    $region33: #{actor_forward.1} parent=1 // pred_fallthru
      _
    // Predicated region
    $region34: #{actor_forward.1} parent=1 // pred_check
      _
    $region35: #{actor_forward.1} parent=1 // pred_check_branch
      %32 = sbr.rel (0) target = $region37
    $region36: #{actor_forward.1} parent=1 // pred_region
      _
    $region37: #{actor_forward.1} parent=1 // pred_fallthru
      _
    %v34 = vld [vmem:[%s0] sm:$0xf]
    %v35 = vld [vmem:[%s1] sm:$0xf]
    %v36 = vld [vmem:[%s1 + $0x4] sm:$0xf]
    %v37 = vld [vmem:[%s2] sm:$0x1]
    %v39 = vlaneseq
    %v40 = vshrl.u32 %v39, 7
    %v41 = vsub.s32 0, %v40
    %v42 = vrot.slane %v37, %v41
    %v46 = vunpack.c.l.b16 %v35
    %v47 = vunpack.c.l.b16 %v36
    %v48 = vpack.c.b16 %v47, %v46
    %vm50 = vcmask 130048
    %v52 = vsel %vm50, %v34, 0
    %54 = vmatprep.subr.bf16.mxu0 0
    %55 = vmatpush1.bf16.msra.mxu0 %v48
    %56 = vmatprep.subr.bf16.mxu0 0
    %57 = vmatpush1.bf16.msra.mxu0 0
    %58 = vmatprep.subr.bf16.mxu0 0
    %59 = vmatpush1.bf16.msra.mxu0 0
    %60 = vmatprep.subr.bf16.mxu0 0
    %61 = vmatpush1.bf16.msra.mxu0 0
    %62 = vmatprep.subr.bf16.mxu0 0
    %63 = vmatpush1.bf16.msra.mxu0 0
    %64 = vmatprep.subr.bf16.mxu0 0
    %65 = vmatpush1.bf16.msra.mxu0 0
    %66 = vmatprep.subr.bf16.mxu0 0
    %67 = vmatpush1.bf16.msra.mxu0 0
    %68 = vmatprep.subr.bf16.mxu0 0
    %69 = vmatpush1.bf16.msra.mxu0 0
    %70 = vmatprep.subr.bf16.mxu0 0
    %71 = vmatpush1.bf16.msra.mxu0 0
    %72 = vmatprep.subr.bf16.mxu0 0
    %73 = vmatpush1.bf16.msra.mxu0 0
    %74 = vmatprep.subr.bf16.mxu0 0
    %75 = vmatpush1.bf16.msra.mxu0 0
    %76 = vmatprep.subr.bf16.mxu0 0
    %77 = vmatpush1.bf16.msra.mxu0 0
    %78 = vmatprep.subr.bf16.mxu0 0
    %79 = vmatpush1.bf16.msra.mxu0 0
    %80 = vmatprep.subr.bf16.mxu0 0
    %81 = vmatpush1.bf16.msra.mxu0 0
    %82 = vmatprep.subr.bf16.mxu0 0
    %83 = vmatpush1.bf16.msra.mxu0 0
    %84 = vmatprep.subr.bf16.mxu0 0
    %85 = vmatpush1.bf16.msra.mxu0 0
    %86 = vmatprep.mubr.bf16.mxu0 0
    %87 = vmatmul.mubr.bf16.gmra.mrb[0].mxu0 %v52
    %v88 = vpop.f32.mrb[0].mxu0
    %v89 = vadd.f32 %v42, %v88
    %v90 = vpop.f32.mrb[0].mxu0
    %v91 = vpop.f32.mrb[0].mxu0
    %v92 = vpop.f32.mrb[0].mxu0
    %93 = vdwg.mxu0
    %v94 = vmax.f32 %v89, 0.0
    %v95 = vpack.c.bf16 %v94, %v94
    %v96 = vld [vmem:[%s3] sm:$0xf]
    %v97 = vld [vmem:[%s3 + $0x4] sm:$0xf]
    %v98 = vld [vmem:[%s3 + $0x8] sm:$0xf]
    %v99 = vld [vmem:[%s3 + $0xc] sm:$0xf]
    %v100 = vld [vmem:[%s3 + $0x10] sm:$0xf]
    %v101 = vld [vmem:[%s3 + $0x14] sm:$0xf]
    %v102 = vld [vmem:[%s3 + $0x18] sm:$0xf]
    %v103 = vld [vmem:[%s3 + $0x1c] sm:$0xf]
    %v104 = vld [vmem:[%s4] sm:$0x1]
    %v106 = vlaneseq
    %v107 = vshrl.u32 %v106, 7
    %v108 = vsub.s32 0, %v107
    %v109 = vrot.slane %v104, %v108
    %v119 = vunpack.c.l.b16 %v96
    %v120 = vunpack.c.l.b16 %v97
    %v121 = vunpack.c.l.b16 %v98
    %v122 = vunpack.c.l.b16 %v99
    %v123 = vunpack.c.l.b16 %v100
    %v124 = vunpack.c.l.b16 %v101
    %v125 = vunpack.c.l.b16 %v102
    %v126 = vunpack.c.l.b16 %v103
    %v127 = vpack.c.b16 %v120, %v119
    %v128 = vpack.c.b16 %v122, %v121
    %v129 = vpack.c.b16 %v124, %v123
    %v130 = vpack.c.b16 %v126, %v125
    %vm135 = vcmask 523264
    %v137 = vsel %vm135, %v95, 0
    %139 = vmatprep.subr.bf16.mxu0 0
    %140 = vmatpush1.bf16.msra.mxu0 %v127
    %141 = vmatprep.subr.bf16.mxu0 0
    %142 = vmatpush1.bf16.msra.mxu0 %v128
    %143 = vmatprep.subr.bf16.mxu0 0
    %144 = vmatpush1.bf16.msra.mxu0 %v129
    %145 = vmatprep.subr.bf16.mxu0 0
    %146 = vmatpush1.bf16.msra.mxu0 %v130
    %147 = vmatprep.subr.bf16.mxu0 0
    %148 = vmatpush1.bf16.msra.mxu0 0
    %149 = vmatprep.subr.bf16.mxu0 0
    %150 = vmatpush1.bf16.msra.mxu0 0
    %151 = vmatprep.subr.bf16.mxu0 0
    %152 = vmatpush1.bf16.msra.mxu0 0
    %153 = vmatprep.subr.bf16.mxu0 0
    %154 = vmatpush1.bf16.msra.mxu0 0
    %155 = vmatprep.subr.bf16.mxu0 0
    %156 = vmatpush1.bf16.msra.mxu0 0
    %157 = vmatprep.subr.bf16.mxu0 0
    %158 = vmatpush1.bf16.msra.mxu0 0
    %159 = vmatprep.subr.bf16.mxu0 0
    %160 = vmatpush1.bf16.msra.mxu0 0
    %161 = vmatprep.subr.bf16.mxu0 0
    %162 = vmatpush1.bf16.msra.mxu0 0
    %163 = vmatprep.subr.bf16.mxu0 0
    %164 = vmatpush1.bf16.msra.mxu0 0
    %165 = vmatprep.subr.bf16.mxu0 0
    %166 = vmatpush1.bf16.msra.mxu0 0
    %167 = vmatprep.subr.bf16.mxu0 0
    %168 = vmatpush1.bf16.msra.mxu0 0
    %169 = vmatprep.subr.bf16.mxu0 0
    %170 = vmatpush1.bf16.msra.mxu0 0
    %171 = vmatprep.mubr.bf16.mxu0 0
    %172 = vmatmul.mubr.bf16.gmra.mrb[0].mxu0 %v137
    %v173 = vpop.f32.mrb[0].mxu0
    %v174 = vadd.f32 %v109, %v173
    %v175 = vpop.f32.mrb[0].mxu0
    %v176 = vpop.f32.mrb[0].mxu0
    %v177 = vpop.f32.mrb[0].mxu0
    %178 = vdwg.mxu0
    %v179 = vmax.f32 %v174, 0.0
    %v180 = vpack.c.bf16 %v179, %v179
    %v181 = vld [vmem:[%s5] sm:$0xf]
    %v182 = vld [vmem:[%s5 + $0x4] sm:$0xf]
    %v183 = vld [vmem:[%s5 + $0x8] sm:$0xf]
    %v184 = vld [vmem:[%s5 + $0xc] sm:$0xf]
    %v185 = vld [vmem:[%s5 + $0x10] sm:$0xf]
    %v186 = vld [vmem:[%s5 + $0x14] sm:$0xf]
    %v187 = vld [vmem:[%s5 + $0x18] sm:$0xf]
    %v188 = vld [vmem:[%s5 + $0x1c] sm:$0xf]
    %v189 = vld [vmem:[%s6] sm:$0x1]
    %v191 = vlaneseq
    %v192 = vshrl.u32 %v191, 7
    %v193 = vsub.s32 0, %v192
    %v194 = vrot.slane %v189, %v193
    %v204 = vunpack.c.l.b16 %v181
    %v205 = vunpack.c.l.b16 %v182
    %v206 = vunpack.c.l.b16 %v183
    %v207 = vunpack.c.l.b16 %v184
    %v208 = vunpack.c.l.b16 %v185
    %v209 = vunpack.c.l.b16 %v186
    %v210 = vunpack.c.l.b16 %v187
    %v211 = vunpack.c.l.b16 %v188
    %v212 = vpack.c.b16 %v205, %v204
    %v213 = vpack.c.b16 %v207, %v206
    %v214 = vpack.c.b16 %v209, %v208
    %v215 = vpack.c.b16 %v211, %v210
    %v221 = vsel %vm135, %v180, 0
    %223 = vmatprep.subr.bf16.mxu0 0
    %224 = vmatpush1.bf16.msra.mxu0 %v212
    %225 = vmatprep.subr.bf16.mxu0 0
    %226 = vmatpush1.bf16.msra.mxu0 %v213
    %227 = vmatprep.subr.bf16.mxu0 0
    %228 = vmatpush1.bf16.msra.mxu0 %v214
    %229 = vmatprep.subr.bf16.mxu0 0
    %230 = vmatpush1.bf16.msra.mxu0 %v215
    %231 = vmatprep.subr.bf16.mxu0 0
    %232 = vmatpush1.bf16.msra.mxu0 0
    %233 = vmatprep.subr.bf16.mxu0 0
    %234 = vmatpush1.bf16.msra.mxu0 0
    %235 = vmatprep.subr.bf16.mxu0 0
    %236 = vmatpush1.bf16.msra.mxu0 0
    %237 = vmatprep.subr.bf16.mxu0 0
    %238 = vmatpush1.bf16.msra.mxu0 0
    %239 = vmatprep.subr.bf16.mxu0 0
    %240 = vmatpush1.bf16.msra.mxu0 0
    %241 = vmatprep.subr.bf16.mxu0 0
    %242 = vmatpush1.bf16.msra.mxu0 0
    %243 = vmatprep.subr.bf16.mxu0 0
    %244 = vmatpush1.bf16.msra.mxu0 0
    %245 = vmatprep.subr.bf16.mxu0 0
    %246 = vmatpush1.bf16.msra.mxu0 0
    %247 = vmatprep.subr.bf16.mxu0 0
    %248 = vmatpush1.bf16.msra.mxu0 0
    %249 = vmatprep.subr.bf16.mxu0 0
    %250 = vmatpush1.bf16.msra.mxu0 0
    %251 = vmatprep.subr.bf16.mxu0 0
    %252 = vmatpush1.bf16.msra.mxu0 0
    %253 = vmatprep.subr.bf16.mxu0 0
    %254 = vmatpush1.bf16.msra.mxu0 0
    %255 = vmatprep.mubr.bf16.mxu0 0
    %256 = vmatmul.mubr.bf16.gmra.mrb[0].mxu0 %v221
    %v257 = vpop.f32.mrb[0].mxu0
    %v258 = vadd.f32 %v194, %v257
    %v259 = vpop.f32.mrb[0].mxu0
    %v260 = vpop.f32.mrb[0].mxu0
    %v261 = vpop.f32.mrb[0].mxu0
    %262 = vdwg.mxu0
    %v263 = vmax.f32 %v258, 0.0
    %v264 = vpack.c.bf16 %v263, %v263
    %v265 = vld [vmem:[%s7] sm:$0xf]
    %v266 = vld [vmem:[%s7 + $0x4] sm:$0xf]
    %v267 = vld [vmem:[%s7 + $0x8] sm:$0xf]
    %v268 = vld [vmem:[%s7 + $0xc] sm:$0xf]
    %v269 = vld [vmem:[%s8] sm:$0x1]
    %v271 = vlaneseq
    %v272 = vshrl.u32 %v271, 7
    %v273 = vsub.s32 0, %v272
    %v274 = vrot.slane %v269, %v273
    %v280 = vunpack.c.l.b16 %v265
    %v281 = vunpack.c.l.b16 %v266
    %v282 = vunpack.c.l.b16 %v267
    %v283 = vunpack.c.l.b16 %v268
    %v284 = vpack.c.b16 %v281, %v280
    %v285 = vpack.c.b16 %v283, %v282
    %vm288 = vcmask 261120
    %v290 = vsel %vm288, %v264, 0
    %292 = vmatprep.subr.bf16.mxu0 0
    %293 = vmatpush1.bf16.msra.mxu0 %v284
    %294 = vmatprep.subr.bf16.mxu0 0
    %295 = vmatpush1.bf16.msra.mxu0 %v285
    %296 = vmatprep.subr.bf16.mxu0 0
    %297 = vmatpush1.bf16.msra.mxu0 0
    %298 = vmatprep.subr.bf16.mxu0 0
    %299 = vmatpush1.bf16.msra.mxu0 0
    %300 = vmatprep.subr.bf16.mxu0 0
    %301 = vmatpush1.bf16.msra.mxu0 0
    %302 = vmatprep.subr.bf16.mxu0 0
    %303 = vmatpush1.bf16.msra.mxu0 0
    %304 = vmatprep.subr.bf16.mxu0 0
    %305 = vmatpush1.bf16.msra.mxu0 0
    %306 = vmatprep.subr.bf16.mxu0 0
    %307 = vmatpush1.bf16.msra.mxu0 0
    %308 = vmatprep.subr.bf16.mxu0 0
    %309 = vmatpush1.bf16.msra.mxu0 0
    %310 = vmatprep.subr.bf16.mxu0 0
    %311 = vmatpush1.bf16.msra.mxu0 0
    %312 = vmatprep.subr.bf16.mxu0 0
    %313 = vmatpush1.bf16.msra.mxu0 0
    %314 = vmatprep.subr.bf16.mxu0 0
    %315 = vmatpush1.bf16.msra.mxu0 0
    %316 = vmatprep.subr.bf16.mxu0 0
    %317 = vmatpush1.bf16.msra.mxu0 0
    %318 = vmatprep.subr.bf16.mxu0 0
    %319 = vmatpush1.bf16.msra.mxu0 0
    %320 = vmatprep.subr.bf16.mxu0 0
    %321 = vmatpush1.bf16.msra.mxu0 0
    %322 = vmatprep.subr.bf16.mxu0 0
    %323 = vmatpush1.bf16.msra.mxu0 0
    %324 = vmatprep.mubr.bf16.mxu0 0
    %325 = vmatmul.mubr.bf16.gmra.mrb[0].mxu0 %v290
    %v326 = vpop.f32.mrb[0].mxu0
    %v327 = vadd.f32 %v274, %v326
    %v328 = vpop.f32.mrb[0].mxu0
    %v329 = vpop.f32.mrb[0].mxu0
    %v330 = vpop.f32.mrb[0].mxu0
    %331 = vdwg.mxu0
    %v332 = vtanh.pop %v327
    %vm333 = vcmask 64512
    %334 = vst.msk [vmem:[#allocation2] sm:$0xff] %vm333, %v332
    // Predicated region
    $region38: #{actor_forward.1} parent=1 // pred_check
      _
    $region39: #{actor_forward.1} parent=1 // pred_check_branch
      %336 = sbr.rel (0) target = $region41
    $region40: #{actor_forward.1} parent=1 // pred_region
      %s338 = ssub.s32 128, 128
      %339 = vsyncadd [#allocation3], %s338
      %s341 = sshll.u32 [#allocation2], 4
      %s342 = int_to_ptr.vmem [resolvable:$true] %s341
      %344 = dma.vmem_to_hbm [thread:$0]  %s342, 128, %s9, [#allocation3]
    $region41: #{actor_forward.1} parent=1 // pred_fallthru
      _
    // Predicated region
    $region42: #{actor_forward.1} parent=1 // pred_check
      _
    $region43: #{actor_forward.1} parent=1 // pred_check_branch
      %346 = sbr.rel (0) target = $region45
    $region44: #{actor_forward.1} parent=1 // pred_region
      %347 = dma.done [#allocation3], 128
    $region45: #{actor_forward.1} parent=1 // pred_fallthru
      _
    %348 = vsyncpa [#allocation3], 1

</llo_original>
